<compile_context>
chip_gen: v7x
topology: tpu7x:2x2x1
jax: 0.10.0
libtpu: 0.0.40
codegen_flags: <defaults>
</compile_context>

<pallas_src>
import numpy as np
import jax
import jax.numpy as jnp
from jax.experimental import pallas as pl
from jax.experimental.pallas import tpu as pltpu


def _round_up(x, m):
    return ((x + m - 1) // m) * m


def prediction_kernel(x_ref, w1_ref, b1_ref, w2_ref, consts_ref, out_ref):
    """One lane tile of the fused 1x1 conv -> LeakyReLU -> 1x1 conv -> epilogue.

    x_ref     : (Cin, T)        f32   features (channels on sublanes, pixels on lanes)
    w1_ref    : (hid, Cin)      bf16  conv1 weight (resident)
    b1_ref    : (hid, 1)        f32   conv1 bias
    w2_ref    : (out_pad, hid)  bf16  conv2 weight, rows permuted to [bbox|conf|cls], zero padded
    consts_ref: (out_pad, 3)    f32   col0 = conv2 bias, col1 = sigmoid mask, col2 = 0.5 xy shift
    out_ref   : (out_pad, T)    bf16 (or requested out dtype)
    """
    x = x_ref[...].astype(jnp.bfloat16)                      # cast in VMEM; HBM stays f32
    h = jnp.dot(w1_ref[...], x, preferred_element_type=jnp.float32) + b1_ref[...]
    # TODO(synk): Dropout(p=0.3) omitted (inference/eval semantics -> identity).
    h = jnp.where(h >= 0.0, h, 0.2 * h)                      # LeakyReLU(negative_slope=0.2)
    p = jnp.dot(w2_ref[...], h.astype(jnp.bfloat16),
                preferred_element_type=jnp.float32) + consts_ref[:, 0:1]
    sig = jax.nn.sigmoid(p)
    out = jnp.where(consts_ref[:, 1:2] > 0.0, sig, p) - consts_ref[:, 2:3]
    out_ref[...] = out.astype(out_ref.dtype)


def prediction_network(features, params, *, num_bboxes=2, num_classes=20,
                       hw_tile_max=1024, out_dtype=jnp.bfloat16):
    """Mirrors PredictionNetwork.forward (eval mode).

    features: (B, in_dim, H, W) float32 (NCHW, as in PyTorch)
    params  : (w1 (hid, in_dim), b1 (hid,), w2 (out_dim, hid), b2 (out_dim,))
              i.e. PyTorch Conv2d 1x1 weights with the trailing 1x1 squeezed.
    Returns:
      bbox_xywh  : (B, A, 4, H, W)
      conf_scores: (B, A, H, W)
      cls_scores : (B, C, H, W)
    """
    w1, b1, w2, b2 = params
    B, Cin, H, W = features.shape
    hid = w1.shape[0]
    A, C = num_bboxes, num_classes
    out_dim = 5 * A + C
    assert w2.shape == (out_dim, hid)

    hw = H * W
    out_pad = _round_up(out_dim, 8)                     # sublane-aligned output channels

    # Static channel permutation: [x,y,w,h per box | conf per box | classes].
    perm = np.concatenate(
        [np.concatenate([np.arange(5 * a, 5 * a + 4) for a in range(A)]),
         np.array([5 * a + 4 for a in range(A)]),
         np.arange(5 * A, out_dim)]).astype(np.int32)

    # Compile-time per-row epilogue constants, merged into a single block:
    # col0 = conv2 bias (permuted), col1 = 1.0 where sigmoid applies, col2 = 0.5 on x/y rows.
    sig_sel = np.zeros((out_pad, 1), np.float32)
    sig_sel[:5 * A] = 1.0
    xy_shift = np.zeros((out_pad, 1), np.float32)
    for a in range(A):
        xy_shift[4 * a:4 * a + 2] = 0.5

    w1b = jnp.asarray(w1, jnp.bfloat16)
    b1c = jnp.asarray(b1, jnp.float32).reshape(hid, 1)
    w2p = jnp.pad(jnp.asarray(w2)[perm], ((0, out_pad - out_dim), (0, 0))).astype(jnp.bfloat16)
    b2p = jnp.pad(jnp.asarray(b2, jnp.float32)[perm], (0, out_pad - out_dim)).reshape(out_pad, 1)
    consts = jnp.concatenate([b2p, jnp.asarray(sig_sel), jnp.asarray(xy_shift)], axis=1)

    fold_batch = hw <= 256   # small maps: fold B into the lane axis (one tiny wrapper transpose)

    if fold_batch:
        n_cols = B * hw
        hw_tile = min(_round_up(n_cols, 128), hw_tile_max)
        n_tiles = pl.cdiv(n_cols, hw_tile)
        cols_pad = n_tiles * hw_tile
        # (Cin, B*hw): pixels of every batch share the lane axis. Overhead-bound
        # regime, so this tiny transpose is cheaper than B near-empty grid steps.
        x_in = jnp.transpose(features.reshape(B, Cin, hw), (1, 0, 2)).reshape(Cin, n_cols)
        grid = (n_tiles,)
        x_spec = pl.BlockSpec((Cin, hw_tile), lambda t: (0, t))
        const_idx = lambda t: (0, 0)
        out_spec = pl.BlockSpec((out_pad, hw_tile), lambda t: (0, t))
        out_shape = jax.ShapeDtypeStruct((out_pad, cols_pad), out_dtype)
        dims = ("parallel",)
    else:
        hw_tile = min(_round_up(hw, 128), hw_tile_max)
        n_tiles = pl.cdiv(hw, hw_tile)
        cols_pad = n_tiles * hw_tile
        x_in = features.reshape(B, Cin, hw)             # free view, stays f32 in HBM
        grid = (B, n_tiles)
        x_spec = pl.BlockSpec((None, Cin, hw_tile), lambda b, t: (b, 0, t))
        const_idx = lambda b, t: (0, 0)
        out_spec = pl.BlockSpec((None, out_pad, hw_tile), lambda b, t: (b, 0, t))
        out_shape = jax.ShapeDtypeStruct((B, out_pad, cols_pad), out_dtype)
        dims = ("parallel", "parallel")                  # B axis keeps both v7x TCs busy

    in_specs = [
        x_spec,
        pl.BlockSpec((hid, Cin), const_idx),             # w1 (resident)
        pl.BlockSpec((hid, 1), const_idx),               # b1
        pl.BlockSpec((out_pad, hid), const_idx),         # w2 (resident)
        pl.BlockSpec((out_pad, 3), const_idx),           # merged bias / masks
    ]

    out = pl.pallas_call(
        prediction_kernel,
        out_shape=out_shape,
        grid_spec=pltpu.PrefetchScalarGridSpec(
            num_scalar_prefetch=0,
            grid=grid,
            in_specs=in_specs,
            out_specs=out_spec,
        ),
        compiler_params=pltpu.CompilerParams(dimension_semantics=dims),
    )(x_in, w1b, b1c, w2p, consts)

    # Un-fold / trim the spatial padding; heads are contiguous channel slices.
    if fold_batch:
        pred = out[:, :n_cols].reshape(out_pad, B, hw).transpose(1, 0, 2)
    else:
        pred = out[:, :, :hw]

    bbox_xywh = pred[:, :4 * A, :].reshape(B, A, 4, H, W)
    conf_scores = pred[:, 4 * A:5 * A, :].reshape(B, A, H, W)
    cls_scores = pred[:, 5 * A:5 * A + C, :].reshape(B, C, H, W)
    return bbox_xywh, conf_scores, cls_scores


def _reference(features, params, num_bboxes, num_classes):
    """Pure-JAX f32 reference of PredictionNetwork.forward (eval mode)."""
    w1, b1, w2, b2 = params
    B, Cin, H, W = features.shape
    x = features.reshape(B, Cin, H * W)
    h = jnp.einsum('oc,bcn->bon', w1, x) + b1[None, :, None]
    h = jnp.where(h >= 0.0, h, 0.2 * h)
    p = jnp.einsum('oc,bcn->bon', w2, h) + b2[None, :, None]
    pred = p.reshape(B, -1, H, W)
    A = num_bboxes
    off = pred[:, :5 * A].reshape(B, A, 5, H, W)
    bbox = jnp.concatenate([jax.nn.sigmoid(off[:, :, 0:2]) - 0.5,
                            jax.nn.sigmoid(off[:, :, 2:4])], axis=2)
    conf = jax.nn.sigmoid(off[:, :, 4])
    cls = pred[:, 5 * A:]
    return bbox, conf, cls


def _run_case(key, B, in_dim, H, W, hidden_dim, num_bboxes, num_classes):
    out_dim = 5 * num_bboxes + num_classes
    k_feat, k1, k2, k3, k4 = jax.random.split(key, 5)
    features = jax.random.normal(k_feat, (B, in_dim, H, W), jnp.float32)
    w1 = jax.random.normal(k1, (hidden_dim, in_dim), jnp.float32) / jnp.sqrt(in_dim)
    b1 = jax.random.normal(k2, (hidden_dim,), jnp.float32) * 0.01
    w2 = jax.random.normal(k3, (out_dim, hidden_dim), jnp.float32) / jnp.sqrt(hidden_dim)
    b2 = jax.random.normal(k4, (out_dim,), jnp.float32) * 0.01
    params = (w1, b1, w2, b2)

    bbox_xywh, conf_scores, cls_scores = jax.block_until_ready(
        prediction_network(features, params,
                           num_bboxes=num_bboxes, num_classes=num_classes))

    assert bbox_xywh.shape == (B, num_bboxes, 4, H, W)
    assert conf_scores.shape == (B, num_bboxes, H, W)
    assert cls_scores.shape == (B, num_classes, H, W)

    rb, rc, rk = _reference(features, params, num_bboxes, num_classes)
    np.testing.assert_allclose(np.asarray(bbox_xywh, np.float32), np.asarray(rb),
                               rtol=5e-2, atol=5e-2)
    np.testing.assert_allclose(np.asarray(conf_scores, np.float32), np.asarray(rc),
                               rtol=5e-2, atol=5e-2)
    np.testing.assert_allclose(np.asarray(cls_scores, np.float32), np.asarray(rk),
                               rtol=5e-2, atol=5e-2)


if __name__ == "__main__":
    key = jax.random.PRNGKey(0)
    k_a, k_b = jax.random.split(key)

    # Spec shape: (B, in_dim, 7, 7) -> small-map path (batch folded into lanes).
    _run_case(k_a, B=2, in_dim=64, H=7, W=7,
              hidden_dim=128, num_bboxes=2, num_classes=20)

    # Larger feature map -> per-batch 2-D ("parallel","parallel") grid path.
    _run_case(k_b, B=2, in_dim=64, H=20, W=20,
              hidden_dim=128, num_bboxes=2, num_classes=20)

    print("KERNEL_OK")
</pallas_src>

<mosaic_0001>
module attributes {stable_mosaic.version = 11 : i64} {
  func.func @prediction_kernel(%arg0: i32, %arg1: memref<64x128xf32, #tpu.memory_space<vmem>>, %arg2: memref<128x64xbf16, #tpu.memory_space<vmem>>, %arg3: memref<128x1xf32, #tpu.memory_space<vmem>>, %arg4: memref<32x128xbf16, #tpu.memory_space<vmem>>, %arg5: memref<32x3xf32, #tpu.memory_space<vmem>>, %arg6: memref<32x128xbf16, #tpu.memory_space<vmem>>) attributes {dimension_semantics = [#tpu.dimension_semantics<parallel>], iteration_bounds = array<i64: 1>, scalar_prefetch = 0 : i64, scratch_operands = 0 : i64, tpu.core_type = #tpu.core_type<tc>, window_params = [{transform_indices = @transform_0, window_bounds = array<i64: 64, 128>}, {pipeline_mode = #tpu.pipeline_mode<synchronous>, transform_indices = @transform_1, window_bounds = array<i64: 128, 64>}, {pipeline_mode = #tpu.pipeline_mode<synchronous>, transform_indices = @transform_2, window_bounds = array<i64: 128, 1>}, {pipeline_mode = #tpu.pipeline_mode<synchronous>, transform_indices = @transform_3, window_bounds = array<i64: 32, 128>}, {pipeline_mode = #tpu.pipeline_mode<synchronous>, transform_indices = @transform_4, window_bounds = array<i64: 32, 3>}, {transform_indices = @transform_5, window_bounds = array<i64: 32, 128>}]} {
    %c0 = arith.constant 0 : index
    %c0_0 = arith.constant 0 : index
    %0 = vector.load %arg1[%c0, %c0_0] : memref<64x128xf32, #tpu.memory_space<vmem>>, vector<64x128xf32>
    %1 = arith.truncf %0 : vector<64x128xf32> to vector<64x128xbf16>
    %c0_1 = arith.constant 0 : index
    %c0_2 = arith.constant 0 : index
    %2 = vector.load %arg2[%c0_1, %c0_2] : memref<128x64xbf16, #tpu.memory_space<vmem>>, vector<128x64xbf16>
    %cst = arith.constant dense<0.000000e+00> : vector<128x128xf32>
    %3 = tpu.matmul %2, %1, %cst {dimension_numbers = #tpu.dot_dimension_numbers<[1], [0], [0], [1], [0, 0, 1, 1], [], []>} : vector<128x64xbf16>, vector<64x128xbf16>, vector<128x128xf32> -> vector<128x128xf32>
    %c0_3 = arith.constant 0 : index
    %c0_4 = arith.constant 0 : index
    %4 = vector.load %arg3[%c0_3, %c0_4] : memref<128x1xf32, #tpu.memory_space<vmem>>, vector<128x1xf32>
    %5 = vector.broadcast %4 : vector<128x1xf32> to vector<128x128xf32>
    %6 = arith.addf %3, %5 : vector<128x128xf32>
    %cst_5 = arith.constant 0.000000e+00 : f32
    %7 = vector.broadcast %cst_5 : f32 to vector<128x128xf32>
    %8 = arith.cmpf oge, %6, %7 : vector<128x128xf32>
    %cst_6 = arith.constant 2.000000e-01 : f32
    %9 = vector.broadcast %cst_6 : f32 to vector<128x128xf32>
    %10 = arith.mulf %9, %6 : vector<128x128xf32>
    %11 = arith.select %8, %6, %10 : vector<128x128xi1>, vector<128x128xf32>
    %c0_7 = arith.constant 0 : index
    %c0_8 = arith.constant 0 : index
    %12 = vector.load %arg4[%c0_7, %c0_8] : memref<32x128xbf16, #tpu.memory_space<vmem>>, vector<32x128xbf16>
    %13 = arith.truncf %11 : vector<128x128xf32> to vector<128x128xbf16>
    %cst_9 = arith.constant dense<0.000000e+00> : vector<32x128xf32>
    %14 = tpu.matmul %12, %13, %cst_9 {dimension_numbers = #tpu.dot_dimension_numbers<[1], [0], [0], [1], [0, 0, 1, 1], [], []>} : vector<32x128xbf16>, vector<128x128xbf16>, vector<32x128xf32> -> vector<32x128xf32>
    %c0_10 = arith.constant 0 : index
    %c0_11 = arith.constant 0 : index
    %15 = vector.load %arg5[%c0_10, %c0_11] : memref<32x3xf32, #tpu.memory_space<vmem>>, vector<32x1xf32>
    %16 = vector.broadcast %15 : vector<32x1xf32> to vector<32x128xf32>
    %17 = arith.addf %14, %16 : vector<32x128xf32>
    %18 = arith.negf %17 : vector<32x128xf32>
    %19 = math.exp %18 : vector<32x128xf32>
    %cst_12 = arith.constant 1.000000e+00 : f32
    %20 = vector.broadcast %cst_12 : f32 to vector<32x128xf32>
    %21 = arith.addf %20, %19 : vector<32x128xf32>
    %22 = arith.divf %20, %21 : vector<32x128xf32>
    %c0_13 = arith.constant 0 : index
    %c1 = arith.constant 1 : index
    %23 = vector.load %arg5[%c0_13, %c1] : memref<32x3xf32, #tpu.memory_space<vmem>>, vector<32x1xf32>
    %cst_14 = arith.constant 0.000000e+00 : f32
    %24 = vector.broadcast %cst_14 : f32 to vector<32x1xf32>
    %25 = arith.cmpf ogt, %23, %24 : vector<32x1xf32>
    %26 = vector.shape_cast %25 : vector<32x1xi1> to vector<32x1xi1>
    %27 = vector.broadcast %26 : vector<32x1xi1> to vector<32x128xi1>
    %28 = arith.select %27, %22, %17 : vector<32x128xi1>, vector<32x128xf32>
    %c0_15 = arith.constant 0 : index
    %c2 = arith.constant 2 : index
    %29 = vector.load %arg5[%c0_15, %c2] : memref<32x3xf32, #tpu.memory_space<vmem>>, vector<32x1xf32>
    %30 = vector.broadcast %29 : vector<32x1xf32> to vector<32x128xf32>
    %31 = arith.subf %28, %30 : vector<32x128xf32>
    %32 = arith.truncf %31 : vector<32x128xf32> to vector<32x128xbf16>
    %c0_16 = arith.constant 0 : index
    %c0_17 = arith.constant 0 : index
    %33 = vector.load %arg6[%c0_16, %c0_17] : memref<32x128xbf16, #tpu.memory_space<vmem>>, vector<32x128xbf16>
    tpu.vector_store %arg6[%c0_16, %c0_17], %32 {strides = array<i32>} : memref<32x128xbf16, #tpu.memory_space<vmem>>, vector<32x128xbf16>,
    return
  }
  func.func @transform_0(%arg0: i32) -> (i32, i32) {
    %c0_i32 = arith.constant 0 : i32
    %c0_i32_0 = arith.constant 0 : i32
    return %c0_i32, %arg0 : i32, i32
  }
  func.func @transform_1(%arg0: i32) -> (i32, i32) {
    %c0_i32 = arith.constant 0 : i32
    %c0_i32_0 = arith.constant 0 : i32
    %c0_i32_1 = arith.constant 0 : i32
    return %c0_i32, %c0_i32_0 : i32, i32
  }
  func.func @transform_2(%arg0: i32) -> (i32, i32) {
    %c0_i32 = arith.constant 0 : i32
    %c0_i32_0 = arith.constant 0 : i32
    %c0_i32_1 = arith.constant 0 : i32
    return %c0_i32, %c0_i32_0 : i32, i32
  }
  func.func @transform_3(%arg0: i32) -> (i32, i32) {
    %c0_i32 = arith.constant 0 : i32
    %c0_i32_0 = arith.constant 0 : i32
    %c0_i32_1 = arith.constant 0 : i32
    return %c0_i32, %c0_i32_0 : i32, i32
  }
  func.func @transform_4(%arg0: i32) -> (i32, i32) {
    %c0_i32 = arith.constant 0 : i32
    %c0_i32_0 = arith.constant 0 : i32
    %c0_i32_1 = arith.constant 0 : i32
    return %c0_i32, %c0_i32_0 : i32, i32
  }
  func.func @transform_5(%arg0: i32) -> (i32, i32) {
    %c0_i32 = arith.constant 0 : i32
    %c0_i32_0 = arith.constant 0 : i32
    return %c0_i32, %arg0 : i32, i32
  }
}

</mosaic_0001>

<llo_original>
// kernel: tpu_custom_call.1
$region0: #{tpu_custom_call.1}
  #allocation0 [shape = 'u32[]', space=smem, size = 0x4, offset = 0x4, fixed_abs, tag = 'smem constant byte address 0x4 - core index']
  #allocation1 [shape = 'u32[144,128]{1,0:T(1,128)}', space=vmem, size = 0x12000, scoped, tag = 'internal scratch']
  %s0 = inlined_call_operand.vmem [shape: f32[64,98], index: 0, kind: input, shape index: {}]
  %s1 = inlined_call_operand.vmem [shape: bf16[128,64], index: 1, kind: input, shape index: {}]
  %s2 = inlined_call_operand.vmem [shape: f32[128,1], index: 2, kind: input, shape index: {}]
  %s3 = inlined_call_operand.vmem [shape: bf16[32,128], index: 3, kind: input, shape index: {}]
  %s4 = inlined_call_operand.vmem [shape: f32[32,3], index: 4, kind: input, shape index: {}]
  %s5 = inlined_call_operand.hbm [shape: bf16[32,128], index: 5, kind: output, shape index: {}]
  %s6 = sld [smem:[#allocation0]]
  $region30: #{tpu_custom_call.1} parent=0
    _
  %s8 = ssub.s32 1, %s6
  %s9 = scalar_select 0, %s8, %s6
  $region1: #{tpu_custom_call.1} parent=0
    #allocation2 [shape = 'u8[8192]{0}', space=vmem, size = 0x2000, scoped, tag = 'output window, operand 0, single buffered']
    #allocation3 [shape = 's32[1]{0}', space=sflag, size = 0x4, scoped, tag = 'scoped memory for tpu_custom_call.1']
    %10 = vsyncpa [#allocation3], 0
    // Predicated region
    $region2: #{tpu_custom_call.1} parent=1 // pred_check
      _
    $region3: #{tpu_custom_call.1} parent=1 // pred_check_branch
      %12 = sbr.rel (0) target = $region5
    $region4: #{tpu_custom_call.1} parent=1 // pred_region
      _
    $region5: #{tpu_custom_call.1} parent=1 // pred_fallthru
      _
    // Predicated region
    $region6: #{tpu_custom_call.1} parent=1 // pred_check
      _
    $region7: #{tpu_custom_call.1} parent=1 // pred_check_branch
      %14 = sbr.rel (0) target = $region9
    $region8: #{tpu_custom_call.1} parent=1 // pred_region
      _
    $region9: #{tpu_custom_call.1} parent=1 // pred_fallthru
      _
    // Predicated region
    $region10: #{tpu_custom_call.1} parent=1 // pred_check
      _
    $region11: #{tpu_custom_call.1} parent=1 // pred_check_branch
      %16 = sbr.rel (0) target = $region13
    $region12: #{tpu_custom_call.1} parent=1 // pred_region
      _
    $region13: #{tpu_custom_call.1} parent=1 // pred_fallthru
      _
    // Predicated region
    $region14: #{tpu_custom_call.1} parent=1 // pred_check
      _
    $region15: #{tpu_custom_call.1} parent=1 // pred_check_branch
      %18 = sbr.rel (0) target = $region17
    $region16: #{tpu_custom_call.1} parent=1 // pred_region
      _
    $region17: #{tpu_custom_call.1} parent=1 // pred_fallthru
      _
    // Predicated region
    $region18: #{tpu_custom_call.1} parent=1 // pred_check
      _
    $region19: #{tpu_custom_call.1} parent=1 // pred_check_branch
      %20 = sbr.rel (0) target = $region21
    $region20: #{tpu_custom_call.1} parent=1 // pred_region
      _
    $region21: #{tpu_custom_call.1} parent=1 // pred_fallthru
      _
    %v22 = vld [vmem:[%s0] sm:$0xff]
    %v23 = vld [vmem:[%s0 + $0x8] sm:$0xff]
    %v24 = vld [vmem:[%s0 + $0x10] sm:$0xff]
    %v25 = vld [vmem:[%s0 + $0x18] sm:$0xff]
    %v26 = vld [vmem:[%s0 + $0x20] sm:$0xff]
    %v27 = vld [vmem:[%s0 + $0x28] sm:$0xff]
    %v28 = vld [vmem:[%s0 + $0x30] sm:$0xff]
    %v29 = vld [vmem:[%s0 + $0x38] sm:$0xff]
    %v30 = vpack.c.bf16 %v23, %v22
    %v31 = vpack.c.bf16 %v25, %v24
    %v32 = vpack.c.bf16 %v27, %v26
    %v33 = vpack.c.bf16 %v29, %v28
    %v34 = vld [vmem:[%s1] sm:$0xf]
    %v35 = vld [vmem:[%s1 + $0x4] sm:$0xf]
    %v36 = vld [vmem:[%s1 + $0x8] sm:$0xf]
    %v37 = vld [vmem:[%s1 + $0xc] sm:$0xf]
    %v38 = vld [vmem:[%s1 + $0x10] sm:$0xf]
    %v39 = vld [vmem:[%s1 + $0x14] sm:$0xf]
    %v40 = vld [vmem:[%s1 + $0x18] sm:$0xf]
    %v41 = vld [vmem:[%s1 + $0x1c] sm:$0xf]
    %v42 = vld [vmem:[%s1 + $0x20] sm:$0xf]
    %v43 = vld [vmem:[%s1 + $0x24] sm:$0xf]
    %v44 = vld [vmem:[%s1 + $0x28] sm:$0xf]
    %v45 = vld [vmem:[%s1 + $0x2c] sm:$0xf]
    %v46 = vld [vmem:[%s1 + $0x30] sm:$0xf]
    %v47 = vld [vmem:[%s1 + $0x34] sm:$0xf]
    %v48 = vld [vmem:[%s1 + $0x38] sm:$0xf]
    %v49 = vld [vmem:[%s1 + $0x3c] sm:$0xf]
    %v50 = vld [vmem:[%s2] sm:$0xff]
    %v51 = vld [vmem:[%s2 + $0x8] sm:$0xff]
    %v52 = vld [vmem:[%s2 + $0x10] sm:$0xff]
    %v53 = vld [vmem:[%s2 + $0x18] sm:$0xff]
    %v54 = vld [vmem:[%s2 + $0x20] sm:$0xff]
    %v55 = vld [vmem:[%s2 + $0x28] sm:$0xff]
    %v56 = vld [vmem:[%s2 + $0x30] sm:$0xff]
    %v57 = vld [vmem:[%s2 + $0x38] sm:$0xff]
    %v58 = vld [vmem:[%s2 + $0x40] sm:$0xff]
    %v59 = vld [vmem:[%s2 + $0x48] sm:$0xff]
    %v60 = vld [vmem:[%s2 + $0x50] sm:$0xff]
    %v61 = vld [vmem:[%s2 + $0x58] sm:$0xff]
    %v62 = vld [vmem:[%s2 + $0x60] sm:$0xff]
    %v63 = vld [vmem:[%s2 + $0x68] sm:$0xff]
    %v64 = vld [vmem:[%s2 + $0x70] sm:$0xff]
    %v65 = vld [vmem:[%s2 + $0x78] sm:$0xff]
    %67 = vset.pattern.permute.xlu0 0
    %68 = vperm.xlu0 %67, %v50
    %v69 = vpop.permute.xlu0 %68
    %72 = vset.pattern.permute.xlu0 0
    %73 = vperm.xlu0 %72, %v51
    %v74 = vpop.permute.xlu0 %73
    %77 = vset.pattern.permute.xlu0 0
    %78 = vperm.xlu0 %77, %v52
    %v79 = vpop.permute.xlu0 %78
    %82 = vset.pattern.permute.xlu0 0
    %83 = vperm.xlu0 %82, %v53
    %v84 = vpop.permute.xlu0 %83
    %87 = vset.pattern.permute.xlu0 0
    %88 = vperm.xlu0 %87, %v54
    %v89 = vpop.permute.xlu0 %88
    %92 = vset.pattern.permute.xlu0 0
    %93 = vperm.xlu0 %92, %v55
    %v94 = vpop.permute.xlu0 %93
    %97 = vset.pattern.permute.xlu0 0
    %98 = vperm.xlu0 %97, %v56
    %v99 = vpop.permute.xlu0 %98
    %102 = vset.pattern.permute.xlu0 0
    %103 = vperm.xlu0 %102, %v57
    %v104 = vpop.permute.xlu0 %103
    %107 = vset.pattern.permute.xlu0 0
    %108 = vperm.xlu0 %107, %v58
    %v109 = vpop.permute.xlu0 %108
    %112 = vset.pattern.permute.xlu0 0
    %113 = vperm.xlu0 %112, %v59
    %v114 = vpop.permute.xlu0 %113
    %117 = vset.pattern.permute.xlu0 0
    %118 = vperm.xlu0 %117, %v60
    %v119 = vpop.permute.xlu0 %118
    %122 = vset.pattern.permute.xlu0 0
    %123 = vperm.xlu0 %122, %v61
    %v124 = vpop.permute.xlu0 %123
    %127 = vset.pattern.permute.xlu0 0
    %128 = vperm.xlu0 %127, %v62
    %v129 = vpop.permute.xlu0 %128
    %132 = vset.pattern.permute.xlu0 0
    %133 = vperm.xlu0 %132, %v63
    %v134 = vpop.permute.xlu0 %133
    %137 = vset.pattern.permute.xlu0 0
    %138 = vperm.xlu0 %137, %v64
    %v139 = vpop.permute.xlu0 %138
    %142 = vset.pattern.permute.xlu0 0
    %143 = vperm.xlu0 %142, %v65
    %v144 = vpop.permute.xlu0 %143
    %v162 = vunpack.c.l.b16 %v34
    %v163 = vunpack.c.l.b16 %v35
    %v164 = vunpack.c.l.b16 %v36
    %v165 = vunpack.c.l.b16 %v37
    %v166 = vunpack.c.l.b16 %v38
    %v167 = vunpack.c.l.b16 %v39
    %v168 = vunpack.c.l.b16 %v40
    %v169 = vunpack.c.l.b16 %v41
    %v170 = vunpack.c.l.b16 %v42
    %v171 = vunpack.c.l.b16 %v43
    %v172 = vunpack.c.l.b16 %v44
    %v173 = vunpack.c.l.b16 %v45
    %v174 = vunpack.c.l.b16 %v46
    %v175 = vunpack.c.l.b16 %v47
    %v176 = vunpack.c.l.b16 %v48
    %v177 = vunpack.c.l.b16 %v49
    %v178 = vpack.c.b16 %v163, %v162
    %v179 = vpack.c.b16 %v165, %v164
    %v180 = vpack.c.b16 %v167, %v166
    %v181 = vpack.c.b16 %v169, %v168
    %v182 = vpack.c.b16 %v171, %v170
    %v183 = vpack.c.b16 %v173, %v172
    %v184 = vpack.c.b16 %v175, %v174
    %v185 = vpack.c.b16 %v177, %v176
    %vm186 = vcmask 523264
    %v188 = vsel %vm186, %v178, 0
    %v191 = vsel %vm186, %v179, 0
    %v194 = vsel %vm186, %v180, 0
    %v197 = vsel %vm186, %v181, 0
    %v200 = vsel %vm186, %v182, 0
    %v203 = vsel %vm186, %v183, 0
    %v206 = vsel %vm186, %v184, 0
    %v209 = vsel %vm186, %v185, 0
    %211 = vmatprep.subr.bf16.mxu0 0
    %212 = vmatpush1.bf16.msra.mxu0 %v30
    %213 = vmatprep.subr.bf16.mxu0 0
    %214 = vmatpush1.bf16.msra.mxu0 %v31
    %215 = vmatprep.subr.bf16.mxu0 0
    %216 = vmatpush1.bf16.msra.mxu0 %v32
    %217 = vmatprep.subr.bf16.mxu0 0
    %218 = vmatpush1.bf16.msra.mxu0 %v33
    %219 = vmatprep.subr.bf16.mxu0 0
    %220 = vmatpush1.bf16.msra.mxu0 0
    %221 = vmatprep.subr.bf16.mxu0 0
    %222 = vmatpush1.bf16.msra.mxu0 0
    %223 = vmatprep.subr.bf16.mxu0 0
    %224 = vmatpush1.bf16.msra.mxu0 0
    %225 = vmatprep.subr.bf16.mxu0 0
    %226 = vmatpush1.bf16.msra.mxu0 0
    %227 = vmatprep.subr.bf16.mxu0 0
    %228 = vmatpush1.bf16.msra.mxu0 0
    %229 = vmatprep.subr.bf16.mxu0 0
    %230 = vmatpush1.bf16.msra.mxu0 0
    %231 = vmatprep.subr.bf16.mxu0 0
    %232 = vmatpush1.bf16.msra.mxu0 0
    %233 = vmatprep.subr.bf16.mxu0 0
    %234 = vmatpush1.bf16.msra.mxu0 0
    %235 = vmatprep.subr.bf16.mxu0 0
    %236 = vmatpush1.bf16.msra.mxu0 0
    %237 = vmatprep.subr.bf16.mxu0 0
    %238 = vmatpush1.bf16.msra.mxu0 0
    %239 = vmatprep.subr.bf16.mxu0 0
    %240 = vmatpush1.bf16.msra.mxu0 0
    %241 = vmatprep.subr.bf16.mxu0 0
    %242 = vmatpush1.bf16.msra.mxu0 0
    %243 = vmatprep.mubr.bf16.mxu0 0
    %244 = vmatmul.mubr.bf16.gmra.mrb[0].mxu0 %v188
    %v245 = vpop.f32.mrb[0].mxu0
    %v246 = vadd.f32 %v69, %v245
    %v247 = vpop.f32.mrb[0].mxu0
    %v248 = vpop.f32.mrb[0].mxu0
    %v249 = vadd.f32 %v74, %v248
    %v250 = vpop.f32.mrb[0].mxu0
    %251 = vmatprep.mubr.bf16.mxu0 0
    %252 = vmatmul.mubr.bf16.gmra.mrb[0].mxu0 %v191
    %v253 = vpop.f32.mrb[0].mxu0
    %v254 = vadd.f32 %v79, %v253
    %v255 = vpop.f32.mrb[0].mxu0
    %v256 = vpop.f32.mrb[0].mxu0
    %v257 = vadd.f32 %v84, %v256
    %v258 = vpop.f32.mrb[0].mxu0
    %259 = vmatprep.mubr.bf16.mxu0 0
    %260 = vmatmul.mubr.bf16.gmra.mrb[0].mxu0 %v194
    %v261 = vpop.f32.mrb[0].mxu0
    %v262 = vadd.f32 %v89, %v261
    %v263 = vpop.f32.mrb[0].mxu0
    %v264 = vpop.f32.mrb[0].mxu0
    %v265 = vadd.f32 %v94, %v264
    %v266 = vpop.f32.mrb[0].mxu0
    %267 = vmatprep.mubr.bf16.mxu0 0
    %268 = vmatmul.mubr.bf16.gmra.mrb[0].mxu0 %v197
    %v269 = vpop.f32.mrb[0].mxu0
    %v270 = vadd.f32 %v99, %v269
    %v271 = vpop.f32.mrb[0].mxu0
    %v272 = vpop.f32.mrb[0].mxu0
    %v273 = vadd.f32 %v104, %v272
    %v274 = vpop.f32.mrb[0].mxu0
    %275 = vmatprep.mubr.bf16.mxu0 0
    %276 = vmatmul.mubr.bf16.gmra.mrb[0].mxu0 %v200
    %v277 = vpop.f32.mrb[0].mxu0
    %v278 = vadd.f32 %v109, %v277
    %v279 = vpop.f32.mrb[0].mxu0
    %v280 = vpop.f32.mrb[0].mxu0
    %v281 = vadd.f32 %v114, %v280
    %v282 = vpop.f32.mrb[0].mxu0
    %283 = vmatprep.mubr.bf16.mxu0 0
    %284 = vmatmul.mubr.bf16.gmra.mrb[0].mxu0 %v203
    %v285 = vpop.f32.mrb[0].mxu0
    %v286 = vadd.f32 %v119, %v285
    %v287 = vpop.f32.mrb[0].mxu0
    %v288 = vpop.f32.mrb[0].mxu0
    %v289 = vadd.f32 %v124, %v288
    %v290 = vpop.f32.mrb[0].mxu0
    %291 = vmatprep.mubr.bf16.mxu0 0
    %292 = vmatmul.mubr.bf16.gmra.mrb[0].mxu0 %v206
    %v293 = vpop.f32.mrb[0].mxu0
    %v294 = vadd.f32 %v129, %v293
    %v295 = vpop.f32.mrb[0].mxu0
    %v296 = vpop.f32.mrb[0].mxu0
    %v297 = vadd.f32 %v134, %v296
    %v298 = vpop.f32.mrb[0].mxu0
    %299 = vmatprep.mubr.bf16.mxu0 0
    %300 = vmatmul.mubr.bf16.gmra.mrb[0].mxu0 %v209
    %v301 = vpop.f32.mrb[0].mxu0
    %v302 = vadd.f32 %v139, %v301
    %v303 = vpop.f32.mrb[0].mxu0
    %v304 = vpop.f32.mrb[0].mxu0
    %v305 = vadd.f32 %v144, %v304
    %v306 = vpop.f32.mrb[0].mxu0
    %307 = vdwg.mxu0
    %vm308 = vcmp.ge.f32.partialorder %v246, 0.0
    %vm309 = vcmp.ge.f32.partialorder %v249, 0.0
    %vm310 = vcmp.ge.f32.partialorder %v254, 0.0
    %vm311 = vcmp.ge.f32.partialorder %v257, 0.0
    %vm312 = vcmp.ge.f32.partialorder %v262, 0.0
    %vm313 = vcmp.ge.f32.partialorder %v265, 0.0
    %vm314 = vcmp.ge.f32.partialorder %v270, 0.0
    %vm315 = vcmp.ge.f32.partialorder %v273, 0.0
    %vm316 = vcmp.ge.f32.partialorder %v278, 0.0
    %vm317 = vcmp.ge.f32.partialorder %v281, 0.0
    %vm318 = vcmp.ge.f32.partialorder %v286, 0.0
    %vm319 = vcmp.ge.f32.partialorder %v289, 0.0
    %vm320 = vcmp.ge.f32.partialorder %v294, 0.0
    %vm321 = vcmp.ge.f32.partialorder %v297, 0.0
    %vm322 = vcmp.ge.f32.partialorder %v302, 0.0
    %vm323 = vcmp.ge.f32.partialorder %v305, 0.0
    %v324 = vmul.f32 %v246, 0.2
    %v325 = vmul.f32 %v249, 0.2
    %v326 = vmul.f32 %v254, 0.2
    %v327 = vmul.f32 %v257, 0.2
    %v328 = vmul.f32 %v262, 0.2
    %v329 = vmul.f32 %v265, 0.2
    %v330 = vmul.f32 %v270, 0.2
    %v331 = vmul.f32 %v273, 0.2
    %v332 = vmul.f32 %v278, 0.2
    %v333 = vmul.f32 %v281, 0.2
    %v334 = vmul.f32 %v286, 0.2
    %v335 = vmul.f32 %v289, 0.2
    %v336 = vmul.f32 %v294, 0.2
    %v337 = vmul.f32 %v297, 0.2
    %v338 = vmul.f32 %v302, 0.2
    %v339 = vmul.f32 %v305, 0.2
    %v340 = vsel %vm308, %v246, %v324
    %v341 = vsel %vm309, %v249, %v325
    %v342 = vsel %vm310, %v254, %v326
    %v343 = vsel %vm311, %v257, %v327
    %v344 = vsel %vm312, %v262, %v328
    %v345 = vsel %vm313, %v265, %v329
    %v346 = vsel %vm314, %v270, %v330
    %v347 = vsel %vm315, %v273, %v331
    %v348 = vsel %vm316, %v278, %v332
    %v349 = vsel %vm317, %v281, %v333
    %v350 = vsel %vm318, %v286, %v334
    %v351 = vsel %vm319, %v289, %v335
    %v352 = vsel %vm320, %v294, %v336
    %v353 = vsel %vm321, %v297, %v337
    %v354 = vsel %vm322, %v302, %v338
    %v355 = vsel %vm323, %v305, %v339
    %v356 = vld [vmem:[%s3] sm:$0xf]
    %v357 = vld [vmem:[%s3 + $0x4] sm:$0xf]
    %v358 = vld [vmem:[%s3 + $0x8] sm:$0xf]
    %v359 = vld [vmem:[%s3 + $0xc] sm:$0xf]
    %v360 = vpack.c.bf16 %v341, %v340
    %v361 = vpack.c.bf16 %v343, %v342
    %v362 = vpack.c.bf16 %v345, %v344
    %v363 = vpack.c.bf16 %v347, %v346
    %v364 = vpack.c.bf16 %v349, %v348
    %v365 = vpack.c.bf16 %v351, %v350
    %v366 = vpack.c.bf16 %v353, %v352
    %v367 = vpack.c.bf16 %v355, %v354
    %v368 = vld [vmem:[%s4] sm:$0xff]
    %v369 = vld [vmem:[%s4 + $0x8] sm:$0xff]
    %v370 = vld [vmem:[%s4 + $0x10] sm:$0xff]
    %v371 = vld [vmem:[%s4 + $0x18] sm:$0xff]
    %373 = vset.pattern.permute.xlu0 0
    %374 = vperm.xlu0 %373, %v368
    %v375 = vpop.permute.xlu0 %374
    %378 = vset.pattern.permute.xlu0 0
    %379 = vperm.xlu0 %378, %v369
    %v380 = vpop.permute.xlu0 %379
    %383 = vset.pattern.permute.xlu0 0
    %384 = vperm.xlu0 %383, %v370
    %v385 = vpop.permute.xlu0 %384
    %388 = vset.pattern.permute.xlu0 0
    %389 = vperm.xlu0 %388, %v371
    %v390 = vpop.permute.xlu0 %389
    %v396 = vunpack.c.l.b16 %v356
    %v397 = vunpack.c.l.b16 %v357
    %v398 = vunpack.c.l.b16 %v358
    %v399 = vunpack.c.l.b16 %v359
    %v400 = vpack.c.b16 %v397, %v396
    %v401 = vpack.c.b16 %v399, %v398
    %404 = vmatprep.subr.bf16.mxu0 0
    %405 = vmatpush1.bf16.msra.mxu0 %v360
    %406 = vmatprep.subr.bf16.mxu0 0
    %407 = vmatpush1.bf16.msra.mxu0 %v361
    %408 = vmatprep.subr.bf16.mxu0 0
    %409 = vmatpush1.bf16.msra.mxu0 %v362
    %410 = vmatprep.subr.bf16.mxu0 0
    %411 = vmatpush1.bf16.msra.mxu0 %v363
    %412 = vmatprep.subr.bf16.mxu0 0
    %413 = vmatpush1.bf16.msra.mxu0 %v364
    %414 = vmatprep.subr.bf16.mxu0 0
    %415 = vmatpush1.bf16.msra.mxu0 %v365
    %416 = vmatprep.subr.bf16.mxu0 0
    %417 = vmatpush1.bf16.msra.mxu0 %v366
    %418 = vmatprep.subr.bf16.mxu0 0
    %419 = vmatpush1.bf16.msra.mxu0 %v367
    %420 = vmatprep.subr.bf16.mxu0 0
    %421 = vmatpush1.bf16.msra.mxu0 0
    %422 = vmatprep.subr.bf16.mxu0 0
    %423 = vmatpush1.bf16.msra.mxu0 0
    %424 = vmatprep.subr.bf16.mxu0 0
    %425 = vmatpush1.bf16.msra.mxu0 0
    %426 = vmatprep.subr.bf16.mxu0 0
    %427 = vmatpush1.bf16.msra.mxu0 0
    %428 = vmatprep.subr.bf16.mxu0 0
    %429 = vmatpush1.bf16.msra.mxu0 0
    %430 = vmatprep.subr.bf16.mxu0 0
    %431 = vmatpush1.bf16.msra.mxu0 0
    %432 = vmatprep.subr.bf16.mxu0 0
    %433 = vmatpush1.bf16.msra.mxu0 0
    %434 = vmatprep.subr.bf16.mxu0 0
    %435 = vmatpush1.bf16.msra.mxu0 0
    %436 = vmatprep.mubr.bf16.mxu0 0
    %437 = vmatmul.mubr.bf16.gmra.mrb[0].mxu0 %v400
    %v438 = vpop.f32.mrb[0].mxu0
    %v439 = vadd.f32 %v375, %v438
    %v440 = vpop.f32.mrb[0].mxu0
    %v441 = vpop.f32.mrb[0].mxu0
    %v442 = vadd.f32 %v380, %v441
    %v443 = vpop.f32.mrb[0].mxu0
    %444 = vmatprep.mubr.bf16.mxu0 0
    %445 = vmatmul.mubr.bf16.gmra.mrb[0].mxu0 %v401
    %v446 = vpop.f32.mrb[0].mxu0
    %v447 = vadd.f32 %v385, %v446
    %v448 = vpop.f32.mrb[0].mxu0
    %v449 = vpop.f32.mrb[0].mxu0
    %v450 = vadd.f32 %v390, %v449
    %v451 = vpop.f32.mrb[0].mxu0
    %452 = vdwg.mxu0
    %v453 = vxor.u32 %v439, 2147483648
    %v454 = vxor.u32 %v442, 2147483648
    %v455 = vxor.u32 %v447, 2147483648
    %v456 = vxor.u32 %v450, 2147483648
    %v457 = vmul.f32 %v453, 1.442695
    %v458 = vpow.pop %v457
    %v459 = vmul.f32 %v454, 1.442695
    %v460 = vpow.pop %v459
    %v461 = vmul.f32 %v455, 1.442695
    %v462 = vpow.pop %v461
    %v463 = vmul.f32 %v456, 1.442695
    %v464 = vpow.pop %v463
    %v465 = vadd.f32 %v458, 1.0
    %v466 = vadd.f32 %v460, 1.0
    %v467 = vadd.f32 %v462, 1.0
    %v468 = vadd.f32 %v464, 1.0
    %v469 = vrcp.pop %v465
    %v470 = vmul.f32 1.0, %v469
    %v471 = vrcp.pop %v466
    %v472 = vmul.f32 1.0, %v471
    %v473 = vrcp.pop %v467
    %v474 = vmul.f32 1.0, %v473
    %v475 = vrcp.pop %v468
    %v476 = vmul.f32 1.0, %v475
    %vm477 = vcmp.gt.f32.partialorder %v368, 0.0
    %vm478 = vcmp.gt.f32.partialorder %v369, 0.0
    %vm479 = vcmp.gt.f32.partialorder %v370, 0.0
    %vm480 = vcmp.gt.f32.partialorder %v371, 0.0
    %v481 = vsel %vm477, 1, 0
    %v482 = vsel %vm478, 1, 0
    %v483 = vsel %vm479, 1, 0
    %v484 = vsel %vm480, 1, 0
    %485 = vset.pattern.permute.xlu0 1
    %486 = vperm.xlu0 %485, %v481
    %v487 = vpop.permute.xlu0 %486
    %488 = vset.pattern.permute.xlu0 1
    %489 = vperm.xlu0 %488, %v482
    %v490 = vpop.permute.xlu0 %489
    %491 = vset.pattern.permute.xlu0 1
    %492 = vperm.xlu0 %491, %v483
    %v493 = vpop.permute.xlu0 %492
    %494 = vset.pattern.permute.xlu0 1
    %495 = vperm.xlu0 %494, %v484
    %v496 = vpop.permute.xlu0 %495
    %vm497 = vcmp.eq.s32.totalorder %v487, 1
    %vm498 = vcmp.eq.s32.totalorder %v490, 1
    %vm499 = vcmp.eq.s32.totalorder %v493, 1
    %vm500 = vcmp.eq.s32.totalorder %v496, 1
    %v501 = vsel %vm497, %v470, %v439
    %v502 = vsel %vm498, %v472, %v442
    %v503 = vsel %vm499, %v474, %v447
    %v504 = vsel %vm500, %v476, %v450
    %505 = vset.pattern.permute.xlu0 2
    %506 = vperm.xlu0 %505, %v368
    %v507 = vpop.permute.xlu0 %506
    %509 = vset.pattern.permute.xlu0 2
    %510 = vperm.xlu0 %509, %v369
    %v511 = vpop.permute.xlu0 %510
    %513 = vset.pattern.permute.xlu0 2
    %514 = vperm.xlu0 %513, %v370
    %v515 = vpop.permute.xlu0 %514
    %517 = vset.pattern.permute.xlu0 2
    %518 = vperm.xlu0 %517, %v371
    %v519 = vpop.permute.xlu0 %518
    %v521 = vsub.f32 %v501, %v507
    %v522 = vsub.f32 %v502, %v511
    %v523 = vsub.f32 %v503, %v515
    %v524 = vsub.f32 %v504, %v519
    %v525 = vpack.c.bf16 %v522, %v521
    %v526 = vpack.c.bf16 %v524, %v523
    %v529 = vunpack.c.l.b16 %v525
    %v530 = vunpack.c.h.b16 %v525
    %v531 = vunpack.c.l.b16 %v526
    %v532 = vunpack.c.h.b16 %v526
    %v533 = vpack.c.b16 %v529, %v529
    %v534 = vpack.c.b16 %v530, %v530
    %v535 = vpack.c.b16 %v531, %v531
    %v536 = vpack.c.b16 %v532, %v532
    %541 = vst [vmem:[#allocation2] sm:$0xf] %v533
    %542 = vst [vmem:[#allocation2 + $0x4] sm:$0xf] %v534
    %543 = vst [vmem:[#allocation2 + $0x8] sm:$0xf] %v535
    %544 = vst [vmem:[#allocation2 + $0xc] sm:$0xf] %v536
    // Predicated region
    $region22: #{tpu_custom_call.1} parent=1 // pred_check
      _
    $region23: #{tpu_custom_call.1} parent=1 // pred_check_branch
      %546 = sbr.rel (0) target = $region25
    $region24: #{tpu_custom_call.1} parent=1 // pred_region
      %s548 = ssub.s32 256, 256
      %549 = vsyncadd [#allocation3], %s548
      %s550 = sshll.u32 [#allocation2], 4
      %s551 = int_to_ptr.vmem [resolvable:$true] %s550
      %556 = dma.vmem_to_hbm [thread:$0]  %s551, 256, %s5, [#allocation3], 64, 64, 4
    $region25: #{tpu_custom_call.1} parent=1 // pred_fallthru
      _
    // Predicated region
    $region26: #{tpu_custom_call.1} parent=1 // pred_check
      _
    $region27: #{tpu_custom_call.1} parent=1 // pred_check_branch
      %558 = sbr.rel (0) target = $region29
    $region28: #{tpu_custom_call.1} parent=1 // pred_region
      %559 = dma.done [#allocation3], 256
    $region29: #{tpu_custom_call.1} parent=1 // pred_fallthru
      _
    %560 = vsyncpa [#allocation3], 1

</llo_original>
